<compile_context>
chip_gen: v7x
topology: tpu7x:2x2x1
jax: 0.10.0
libtpu: 0.0.40
codegen_flags: <defaults>
</compile_context>

<pallas_src>
import functools

import jax
import jax.numpy as jnp
from jax.experimental import pallas as pl
from jax.experimental.pallas import tpu as pltpu


def _ohem_pixel_kernel(weight_ref, score_ref, target_ref, loss_ref, prob_ref,
                       *, ignore_label, num_classes):
    # weight_ref : (1, C) f32 in SMEM
    # score_ref  : (1, C, TH, TW)        target_ref: (1, TH, TW) int32
    # loss_ref / prob_ref : (1, TH, TW) f32
    t = target_ref[0]                                   # (TH, TW)
    valid = t != ignore_label
    t_safe = jnp.where(valid, t, 0)                     # tmp_target[ignore] = 0

    # Running max over classes: C-1 elementwise maxima on lane-dense tiles.
    m = score_ref[0, 0].astype(jnp.float32)
    for c in range(1, num_classes):
        m = jnp.maximum(m, score_ref[0, c].astype(jnp.float32))

    # Single pass over classes: accumulate the softmax denominator and gather
    # the target-class shifted logit z_t and its class weight w_t.
    # No full softmax / one-hot materialization.
    denom = jnp.zeros_like(m)
    z_t = jnp.zeros_like(m)
    w_t = jnp.zeros_like(m)
    for c in range(num_classes):
        z_c = score_ref[0, c].astype(jnp.float32) - m
        denom = denom + jnp.exp(z_c)
        mask_c = t_safe == c
        z_t = jnp.where(mask_c, z_c, z_t)
        w_t = jnp.where(mask_c, weight_ref[0, c], w_t)  # scalar from SMEM

    # nn.CrossEntropyLoss(weight, ignore_index, reduction='none'):
    #   loss_i = -weight[y_i] * log_softmax_i[y_i]   (0 for ignored pixels)
    logp_t = z_t - jnp.log(denom)
    loss_ref[0] = jnp.where(valid, -w_t * logp_t, 0.0)
    # Target-class softmax prob = exp(logp_t). Ignored pixels get +inf so they
    # (a) sort to the end for the kth-smallest glue and (b) never pass the
    # `prob < threshold` selection.
    prob_ref[0] = jnp.where(valid, jnp.exp(logp_t), jnp.inf)


def _pick_tile(dim, unit, target_tile):
    # Last two block dims must be multiples of (8, 128) or equal the full dim.
    if dim % unit != 0 or dim <= target_tile:
        return dim
    return max(unit, (target_tile // unit) * unit)


def ohem_cross_entropy2(score, target, weight, *, ignore_label=-1, thresh=0.9,
                        min_kept=131072, tile_h=None, tile_w=None):
    N, C, H, W = score.shape
    assert target.shape == (N, H, W)
    assert weight.shape == (C,)
    # TODO(synk): F.upsample bilinear resize path (ph != h or pw != w) not
    # implemented; score and target must have matching spatial sizes.

    min_kept = max(1, int(min_kept))

    # ~2k-8k pixels per grid step; per-block VMEM stays tiny (C*TH*TW*4 bytes,
    # <1 MiB double-buffered) on all generations incl. v7x's 64 MiB VMEM.
    TH = tile_h if tile_h is not None else _pick_tile(H, 8, 16)
    TW = tile_w if tile_w is not None else _pick_tile(W, 128, 512)
    grid = (N, pl.cdiv(H, TH), pl.cdiv(W, TW))

    kernel = functools.partial(_ohem_pixel_kernel, ignore_label=ignore_label,
                               num_classes=C)
    loss, prob = pl.pallas_call(
        kernel,
        grid=grid,
        in_specs=[
            pl.BlockSpec(memory_space=pltpu.MemorySpace.SMEM),       # (1, C) weight
            pl.BlockSpec((1, C, TH, TW), lambda n, i, j: (n, 0, i, j)),
            pl.BlockSpec((1, TH, TW), lambda n, i, j: (n, i, j)),
        ],
        out_specs=(
            pl.BlockSpec((1, TH, TW), lambda n, i, j: (n, i, j)),
            pl.BlockSpec((1, TH, TW), lambda n, i, j: (n, i, j)),
        ),
        out_shape=(
            jax.ShapeDtypeStruct((N, H, W), jnp.float32),
            jax.ShapeDtypeStruct((N, H, W), jnp.float32),
        ),
        compiler_params=pltpu.CompilerParams(
            dimension_semantics=("parallel", "parallel", "parallel")),
    )(weight.reshape(1, C).astype(jnp.float32), score,
      target.astype(jnp.int32))

    # ---- OHEM threshold selection + masked mean (plain-JAX glue) ----
    prob_flat = prob.reshape(-1)          # +inf marks ignored pixels
    loss_flat = loss.reshape(-1)
    n_valid = jnp.sum(jnp.isfinite(prob_flat).astype(jnp.int32))

    # kth smallest valid prob (ignored pixels sort to the end as +inf).
    # TODO(synk): replace the O(P log P) sort with an O(P) histogram / radix
    # selection for megapixel inputs; kept exact here for parity with torch.sort.
    sorted_probs = jnp.sort(prob_flat)
    k = jnp.clip(jnp.minimum(jnp.int32(min_kept), n_valid - 1),
                 0, prob_flat.shape[0] - 1)
    min_value = sorted_probs[k]
    threshold = jnp.maximum(min_value, jnp.float32(thresh))

    sel = prob_flat < threshold           # never true for ignored (+inf) pixels
    cnt = jnp.sum(sel.astype(jnp.float32))
    total = jnp.sum(jnp.where(sel, loss_flat, 0.0))
    # Guard the empty-selection case (PyTorch .mean() of empty would be NaN).
    return total / jnp.maximum(cnt, 1.0)


def _reference(score, target, weight, ignore_label=-1, thresh=0.9, min_kept=131072):
    """Plain-JAX replica of OhemCrossEntropy2.forward for correctness check."""
    N, C, H, W = score.shape
    logp = jax.nn.log_softmax(score, axis=1)
    p = jnp.exp(logp)
    valid = target != ignore_label
    t_safe = jnp.where(valid, target, 0)
    onehot = jax.nn.one_hot(t_safe, C, axis=1)
    nll = -jnp.sum(logp * onehot, axis=1)
    w_t = weight[t_safe]
    pix_loss = jnp.where(valid, w_t * nll, 0.0).reshape(-1)
    p_t = jnp.sum(p * onehot, axis=1).reshape(-1)
    vflat = valid.reshape(-1)
    n_valid = jnp.sum(vflat.astype(jnp.int32))
    sorted_probs = jnp.sort(jnp.where(vflat, p_t, jnp.inf))
    k = jnp.minimum(min_kept, n_valid - 1)
    min_value = sorted_probs[k]
    threshold = jnp.maximum(min_value, jnp.float32(thresh))
    sel = vflat & (p_t < threshold)
    return jnp.sum(jnp.where(sel, pix_loss, 0.0)) / jnp.sum(sel.astype(jnp.float32))


if __name__ == "__main__":
    key = jax.random.PRNGKey(0)
    k1, k2, k3 = jax.random.split(key, 3)

    N, C, H, W = 2, 6, 16, 16          # 6 classes (module's weight has 6 entries)
    score = jax.random.normal(k1, (N, C, H, W), dtype=jnp.float32)
    target = jax.random.randint(k2, (N, H, W), 0, C, dtype=jnp.int32)
    ignore_mask = jax.random.uniform(k3, (N, H, W)) < 0.1
    target = jnp.where(ignore_mask, -1, target).astype(jnp.int32)

    # deterministic class weights from the module's __init__ default
    weight = jnp.array([1.1931, 0.9287, 0.9954, 1.1389, 1.0004, 0.8735],
                       dtype=jnp.float32)

    out = ohem_cross_entropy2(score, target, weight,
                              ignore_label=-1, thresh=0.9, min_kept=131072)
    out = jax.block_until_ready(out)

    ref = jax.block_until_ready(_reference(score, target, weight))
    assert jnp.abs(out - ref) <= 1e-3 + 1e-3 * jnp.abs(ref), (out, ref)

    print("KERNEL_OK")
</pallas_src>

<mosaic_0001>
module attributes {stable_mosaic.version = 11 : i64} {
  func.func @_ohem_pixel_kernel(%arg0: i32, %arg1: i32, %arg2: i32, %arg3: memref<1x6xf32, #tpu.memory_space<smem>>, %arg4: memref<1x6x16x16xf32, #tpu.memory_space<vmem>>, %arg5: memref<1x16x16xi32, #tpu.memory_space<vmem>>, %arg6: memref<1x16x16xf32, #tpu.memory_space<vmem>>, %arg7: memref<1x16x16xf32, #tpu.memory_space<vmem>>) attributes {dimension_semantics = [#tpu.dimension_semantics<parallel>, #tpu.dimension_semantics<parallel>, #tpu.dimension_semantics<parallel>], iteration_bounds = array<i64: 2, 1, 1>, scalar_prefetch = 0 : i64, scratch_operands = 0 : i64, tpu.core_type = #tpu.core_type<tc>, window_params = [{transform_indices = @transform_0, window_bounds = array<i64: 1, 6>}, {transform_indices = @transform_1, window_bounds = array<i64: 1, 6, 16, 16>}, {transform_indices = @transform_2, window_bounds = array<i64: 1, 16, 16>}, {transform_indices = @transform_3, window_bounds = array<i64: 1, 16, 16>}, {transform_indices = @transform_4, window_bounds = array<i64: 1, 16, 16>}]} {
    %c0 = arith.constant 0 : index
    %c0_0 = arith.constant 0 : index
    %c0_1 = arith.constant 0 : index
    %0 = vector.load %arg5[%c0, %c0_0, %c0_1] : memref<1x16x16xi32, #tpu.memory_space<vmem>>, vector<1x16x16xi32>
    %1 = vector.shape_cast %0 : vector<1x16x16xi32> to vector<16x16xi32>
    %c-1_i32 = arith.constant -1 : i32
    %2 = vector.broadcast %c-1_i32 : i32 to vector<16x16xi32>
    %3 = arith.cmpi ne, %1, %2 : vector<16x16xi32>
    %c0_i32 = arith.constant 0 : i32
    %4 = vector.broadcast %c0_i32 : i32 to vector<16x16xi32>
    %5 = arith.select %3, %1, %4 : vector<16x16xi1>, vector<16x16xi32>
    %c0_2 = arith.constant 0 : index
    %c0_3 = arith.constant 0 : index
    %c0_4 = arith.constant 0 : index
    %c0_5 = arith.constant 0 : index
    %6 = vector.load %arg4[%c0_2, %c0_3, %c0_4, %c0_5] : memref<1x6x16x16xf32, #tpu.memory_space<vmem>>, vector<1x1x16x16xf32>
    %7 = vector.shape_cast %6 : vector<1x1x16x16xf32> to vector<16x16xf32>
    %c0_6 = arith.constant 0 : index
    %c1 = arith.constant 1 : index
    %c0_7 = arith.constant 0 : index
    %c0_8 = arith.constant 0 : index
    %8 = vector.load %arg4[%c0_6, %c1, %c0_7, %c0_8] : memref<1x6x16x16xf32, #tpu.memory_space<vmem>>, vector<1x1x16x16xf32>
    %9 = vector.shape_cast %8 : vector<1x1x16x16xf32> to vector<16x16xf32>
    %10 = arith.maximumf %7, %9 : vector<16x16xf32>
    %c0_9 = arith.constant 0 : index
    %c2 = arith.constant 2 : index
    %c0_10 = arith.constant 0 : index
    %c0_11 = arith.constant 0 : index
    %11 = vector.load %arg4[%c0_9, %c2, %c0_10, %c0_11] : memref<1x6x16x16xf32, #tpu.memory_space<vmem>>, vector<1x1x16x16xf32>
    %12 = vector.shape_cast %11 : vector<1x1x16x16xf32> to vector<16x16xf32>
    %13 = arith.maximumf %10, %12 : vector<16x16xf32>
    %c0_12 = arith.constant 0 : index
    %c3 = arith.constant 3 : index
    %c0_13 = arith.constant 0 : index
    %c0_14 = arith.constant 0 : index
    %14 = vector.load %arg4[%c0_12, %c3, %c0_13, %c0_14] : memref<1x6x16x16xf32, #tpu.memory_space<vmem>>, vector<1x1x16x16xf32>
    %15 = vector.shape_cast %14 : vector<1x1x16x16xf32> to vector<16x16xf32>
    %16 = arith.maximumf %13, %15 : vector<16x16xf32>
    %c0_15 = arith.constant 0 : index
    %c4 = arith.constant 4 : index
    %c0_16 = arith.constant 0 : index
    %c0_17 = arith.constant 0 : index
    %17 = vector.load %arg4[%c0_15, %c4, %c0_16, %c0_17] : memref<1x6x16x16xf32, #tpu.memory_space<vmem>>, vector<1x1x16x16xf32>
    %18 = vector.shape_cast %17 : vector<1x1x16x16xf32> to vector<16x16xf32>
    %19 = arith.maximumf %16, %18 : vector<16x16xf32>
    %c0_18 = arith.constant 0 : index
    %c5 = arith.constant 5 : index
    %c0_19 = arith.constant 0 : index
    %c0_20 = arith.constant 0 : index
    %20 = vector.load %arg4[%c0_18, %c5, %c0_19, %c0_20] : memref<1x6x16x16xf32, #tpu.memory_space<vmem>>, vector<1x1x16x16xf32>
    %21 = vector.shape_cast %20 : vector<1x1x16x16xf32> to vector<16x16xf32>
    %22 = arith.maximumf %19, %21 : vector<16x16xf32>
    %cst = arith.constant 0.000000e+00 : f32
    %23 = vector.broadcast %cst : f32 to vector<16x16xf32>
    %cst_21 = arith.constant 0.000000e+00 : f32
    %24 = vector.broadcast %cst_21 : f32 to vector<16x16xf32>
    %cst_22 = arith.constant 0.000000e+00 : f32
    %25 = vector.broadcast %cst_22 : f32 to vector<16x16xf32>
    %c0_23 = arith.constant 0 : index
    %c0_24 = arith.constant 0 : index
    %c0_25 = arith.constant 0 : index
    %c0_26 = arith.constant 0 : index
    %26 = vector.load %arg4[%c0_23, %c0_24, %c0_25, %c0_26] : memref<1x6x16x16xf32, #tpu.memory_space<vmem>>, vector<1x1x16x16xf32>
    %27 = vector.shape_cast %26 : vector<1x1x16x16xf32> to vector<16x16xf32>
    %28 = arith.subf %27, %22 : vector<16x16xf32>
    %29 = math.exp %28 : vector<16x16xf32>
    %30 = arith.addf %23, %29 : vector<16x16xf32>
    %c0_i32_27 = arith.constant 0 : i32
    %31 = vector.broadcast %c0_i32_27 : i32 to vector<16x16xi32>
    %32 = arith.cmpi eq, %5, %31 : vector<16x16xi32>
    %33 = arith.select %32, %28, %24 : vector<16x16xi1>, vector<16x16xf32>
    %c0_28 = arith.constant 0 : index
    %c0_29 = arith.constant 0 : index
    %34 = memref.load %arg3[%c0_28, %c0_29] : memref<1x6xf32, #tpu.memory_space<smem>>
    %35 = vector.broadcast %34 : f32 to vector<16x16xf32>
    %36 = arith.select %32, %35, %25 : vector<16x16xi1>, vector<16x16xf32>
    %c0_30 = arith.constant 0 : index
    %c1_31 = arith.constant 1 : index
    %c0_32 = arith.constant 0 : index
    %c0_33 = arith.constant 0 : index
    %37 = vector.load %arg4[%c0_30, %c1_31, %c0_32, %c0_33] : memref<1x6x16x16xf32, #tpu.memory_space<vmem>>, vector<1x1x16x16xf32>
    %38 = vector.shape_cast %37 : vector<1x1x16x16xf32> to vector<16x16xf32>
    %39 = arith.subf %38, %22 : vector<16x16xf32>
    %40 = math.exp %39 : vector<16x16xf32>
    %41 = arith.addf %30, %40 : vector<16x16xf32>
    %c1_i32 = arith.constant 1 : i32
    %42 = vector.broadcast %c1_i32 : i32 to vector<16x16xi32>
    %43 = arith.cmpi eq, %5, %42 : vector<16x16xi32>
    %44 = arith.select %43, %39, %33 : vector<16x16xi1>, vector<16x16xf32>
    %c0_34 = arith.constant 0 : index
    %c1_35 = arith.constant 1 : index
    %45 = memref.load %arg3[%c0_34, %c1_35] : memref<1x6xf32, #tpu.memory_space<smem>>
    %46 = vector.broadcast %45 : f32 to vector<16x16xf32>
    %47 = arith.select %43, %46, %36 : vector<16x16xi1>, vector<16x16xf32>
    %c0_36 = arith.constant 0 : index
    %c2_37 = arith.constant 2 : index
    %c0_38 = arith.constant 0 : index
    %c0_39 = arith.constant 0 : index
    %48 = vector.load %arg4[%c0_36, %c2_37, %c0_38, %c0_39] : memref<1x6x16x16xf32, #tpu.memory_space<vmem>>, vector<1x1x16x16xf32>
    %49 = vector.shape_cast %48 : vector<1x1x16x16xf32> to vector<16x16xf32>
    %50 = arith.subf %49, %22 : vector<16x16xf32>
    %51 = math.exp %50 : vector<16x16xf32>
    %52 = arith.addf %41, %51 : vector<16x16xf32>
    %c2_i32 = arith.constant 2 : i32
    %53 = vector.broadcast %c2_i32 : i32 to vector<16x16xi32>
    %54 = arith.cmpi eq, %5, %53 : vector<16x16xi32>
    %55 = arith.select %54, %50, %44 : vector<16x16xi1>, vector<16x16xf32>
    %c0_40 = arith.constant 0 : index
    %c2_41 = arith.constant 2 : index
    %56 = memref.load %arg3[%c0_40, %c2_41] : memref<1x6xf32, #tpu.memory_space<smem>>
    %57 = vector.broadcast %56 : f32 to vector<16x16xf32>
    %58 = arith.select %54, %57, %47 : vector<16x16xi1>, vector<16x16xf32>
    %c0_42 = arith.constant 0 : index
    %c3_43 = arith.constant 3 : index
    %c0_44 = arith.constant 0 : index
    %c0_45 = arith.constant 0 : index
    %59 = vector.load %arg4[%c0_42, %c3_43, %c0_44, %c0_45] : memref<1x6x16x16xf32, #tpu.memory_space<vmem>>, vector<1x1x16x16xf32>
    %60 = vector.shape_cast %59 : vector<1x1x16x16xf32> to vector<16x16xf32>
    %61 = arith.subf %60, %22 : vector<16x16xf32>
    %62 = math.exp %61 : vector<16x16xf32>
    %63 = arith.addf %52, %62 : vector<16x16xf32>
    %c3_i32 = arith.constant 3 : i32
    %64 = vector.broadcast %c3_i32 : i32 to vector<16x16xi32>
    %65 = arith.cmpi eq, %5, %64 : vector<16x16xi32>
    %66 = arith.select %65, %61, %55 : vector<16x16xi1>, vector<16x16xf32>
    %c0_46 = arith.constant 0 : index
    %c3_47 = arith.constant 3 : index
    %67 = memref.load %arg3[%c0_46, %c3_47] : memref<1x6xf32, #tpu.memory_space<smem>>
    %68 = vector.broadcast %67 : f32 to vector<16x16xf32>
    %69 = arith.select %65, %68, %58 : vector<16x16xi1>, vector<16x16xf32>
    %c0_48 = arith.constant 0 : index
    %c4_49 = arith.constant 4 : index
    %c0_50 = arith.constant 0 : index
    %c0_51 = arith.constant 0 : index
    %70 = vector.load %arg4[%c0_48, %c4_49, %c0_50, %c0_51] : memref<1x6x16x16xf32, #tpu.memory_space<vmem>>, vector<1x1x16x16xf32>
    %71 = vector.shape_cast %70 : vector<1x1x16x16xf32> to vector<16x16xf32>
    %72 = arith.subf %71, %22 : vector<16x16xf32>
    %73 = math.exp %72 : vector<16x16xf32>
    %74 = arith.addf %63, %73 : vector<16x16xf32>
    %c4_i32 = arith.constant 4 : i32
    %75 = vector.broadcast %c4_i32 : i32 to vector<16x16xi32>
    %76 = arith.cmpi eq, %5, %75 : vector<16x16xi32>
    %77 = arith.select %76, %72, %66 : vector<16x16xi1>, vector<16x16xf32>
    %c0_52 = arith.constant 0 : index
    %c4_53 = arith.constant 4 : index
    %78 = memref.load %arg3[%c0_52, %c4_53] : memref<1x6xf32, #tpu.memory_space<smem>>
    %79 = vector.broadcast %78 : f32 to vector<16x16xf32>
    %80 = arith.select %76, %79, %69 : vector<16x16xi1>, vector<16x16xf32>
    %c0_54 = arith.constant 0 : index
    %c5_55 = arith.constant 5 : index
    %c0_56 = arith.constant 0 : index
    %c0_57 = arith.constant 0 : index
    %81 = vector.load %arg4[%c0_54, %c5_55, %c0_56, %c0_57] : memref<1x6x16x16xf32, #tpu.memory_space<vmem>>, vector<1x1x16x16xf32>
    %82 = vector.shape_cast %81 : vector<1x1x16x16xf32> to vector<16x16xf32>
    %83 = arith.subf %82, %22 : vector<16x16xf32>
    %84 = math.exp %83 : vector<16x16xf32>
    %85 = arith.addf %74, %84 : vector<16x16xf32>
    %c5_i32 = arith.constant 5 : i32
    %86 = vector.broadcast %c5_i32 : i32 to vector<16x16xi32>
    %87 = arith.cmpi eq, %5, %86 : vector<16x16xi32>
    %88 = arith.select %87, %83, %77 : vector<16x16xi1>, vector<16x16xf32>
    %c0_58 = arith.constant 0 : index
    %c5_59 = arith.constant 5 : index
    %89 = memref.load %arg3[%c0_58, %c5_59] : memref<1x6xf32, #tpu.memory_space<smem>>
    %90 = vector.broadcast %89 : f32 to vector<16x16xf32>
    %91 = arith.select %87, %90, %80 : vector<16x16xi1>, vector<16x16xf32>
    %92 = math.log %85 : vector<16x16xf32>
    %93 = arith.subf %88, %92 : vector<16x16xf32>
    %cst_60 = arith.constant 0.000000e+00 : f32
    %94 = vector.broadcast %cst_60 : f32 to vector<16x16xf32>
    %95 = arith.subf %94, %91 : vector<16x16xf32>
    %96 = arith.mulf %95, %93 : vector<16x16xf32>
    %cst_61 = arith.constant 0.000000e+00 : f32
    %97 = vector.broadcast %cst_61 : f32 to vector<16x16xf32>
    %98 = arith.select %3, %96, %97 : vector<16x16xi1>, vector<16x16xf32>
    %c0_62 = arith.constant 0 : index
    %c0_63 = arith.constant 0 : index
    %c0_64 = arith.constant 0 : index
    %99 = vector.load %arg6[%c0_62, %c0_63, %c0_64] : memref<1x16x16xf32, #tpu.memory_space<vmem>>, vector<1x16x16xf32>
    %100 = vector.shape_cast %99 : vector<1x16x16xf32> to vector<16x16xf32>
    %101 = vector.shape_cast %98 : vector<16x16xf32> to vector<1x16x16xf32>
    tpu.vector_store %arg6[%c0_62, %c0_63, %c0_64], %101 {strides = array<i32>} : memref<1x16x16xf32, #tpu.memory_space<vmem>>, vector<1x16x16xf32>,
    %102 = math.exp %93 : vector<16x16xf32>
    %cst_65 = arith.constant 0x7F800000 : f32
    %103 = vector.broadcast %cst_65 : f32 to vector<16x16xf32>
    %104 = arith.select %3, %102, %103 : vector<16x16xi1>, vector<16x16xf32>
    %c0_66 = arith.constant 0 : index
    %c0_67 = arith.constant 0 : index
    %c0_68 = arith.constant 0 : index
    %105 = vector.load %arg7[%c0_66, %c0_67, %c0_68] : memref<1x16x16xf32, #tpu.memory_space<vmem>>, vector<1x16x16xf32>
    %106 = vector.shape_cast %105 : vector<1x16x16xf32> to vector<16x16xf32>
    %107 = vector.shape_cast %104 : vector<16x16xf32> to vector<1x16x16xf32>
    tpu.vector_store %arg7[%c0_66, %c0_67, %c0_68], %107 {strides = array<i32>} : memref<1x16x16xf32, #tpu.memory_space<vmem>>, vector<1x16x16xf32>,
    return
  }
  func.func @transform_0(%arg0: i32, %arg1: i32, %arg2: i32) -> (i32, i32) {
    %c0_i32 = arith.constant 0 : i32
    %c0_i32_0 = arith.constant 0 : i32
    %c0_i32_1 = arith.constant 0 : i32
    return %c0_i32, %c0_i32_0 : i32, i32
  }
  func.func @transform_1(%arg0: i32, %arg1: i32, %arg2: i32) -> (i32, i32, i32, i32) {
    %c0_i32 = arith.constant 0 : i32
    %c0_i32_0 = arith.constant 0 : i32
    return %arg0, %c0_i32, %arg1, %arg2 : i32, i32, i32, i32
  }
  func.func @transform_2(%arg0: i32, %arg1: i32, %arg2: i32) -> (i32, i32, i32) {
    %c0_i32 = arith.constant 0 : i32
    return %arg0, %arg1, %arg2 : i32, i32, i32
  }
  func.func @transform_3(%arg0: i32, %arg1: i32, %arg2: i32) -> (i32, i32, i32) {
    %c0_i32 = arith.constant 0 : i32
    return %arg0, %arg1, %arg2 : i32, i32, i32
  }
  func.func @transform_4(%arg0: i32, %arg1: i32, %arg2: i32) -> (i32, i32, i32) {
    %c0_i32 = arith.constant 0 : i32
    return %arg0, %arg1, %arg2 : i32, i32, i32
  }
}

</mosaic_0001>

<llo_original>
// kernel: tpu_custom_call.1
$region0: #{tpu_custom_call.1}
  #allocation0 [shape = 'u32[]', space=smem, size = 0x4, offset = 0x4, fixed_abs, tag = 'smem constant byte address 0x4 - core index']
  #allocation1 [shape = 'u32[144,128]{1,0:T(1,128)}', space=vmem, size = 0x12000, scoped, tag = 'internal scratch']
  %s0 = inlined_call_operand.hbm [shape: f32[1,6], index: 0, kind: input, shape index: {}]
  %s1 = inlined_call_operand.hbm [shape: f32[2,6,16,16], index: 1, kind: input, shape index: {}]
  %s2 = inlined_call_operand.hbm [shape: s32[2,16,16], index: 2, kind: input, shape index: {}]
  %s3 = inlined_call_operand.hbm [shape: f32[2,16,16], index: 3, kind: output, shape index: {0}]
  %s4 = inlined_call_operand.hbm [shape: f32[2,16,16], index: 4, kind: output, shape index: {1}]
  %5 = xla_tuple %s3, %s4
  %s6 = sld [smem:[#allocation0]]
  $region65: #{tpu_custom_call.1} parent=0
    _
  %s8 = ssub.s32 1, %s6
  %s9 = scalar_select 0, %s8, %s6
  $region1: #{tpu_custom_call.1} parent=0
    #allocation2 [shape = 'u8[512]{0}', space=smem, size = 0x200, scoped, tag = 'input window, operand 0, single buffered']
    #allocation3 [shape = 's32[2]{0}', space=sflag, size = 0x8, scoped, tag = 'scoped memory for tpu_custom_call.1']
    #allocation4 [shape = 's32[2]{0}', space=sflag, size = 0x8, scoped, tag = 'scoped memory for tpu_custom_call.1']
    #allocation5 [shape = 's32[2]{0}', space=sflag, size = 0x8, scoped, tag = 'scoped memory for tpu_custom_call.1']
    #allocation6 [shape = 'u8[98304]{0}', space=vmem, size = 0x18000, scoped, tag = 'input window, operand 1']
    #allocation7 [shape = 'u8[16384]{0}', space=vmem, size = 0x4000, scoped, tag = 'input window, operand 2']
    #allocation8 [shape = 's32[2]{0}', space=sflag, size = 0x8, scoped, tag = 'scoped memory for tpu_custom_call.1']
    #allocation9 [shape = 'u8[16384]{0}', space=vmem, size = 0x4000, scoped, tag = 'output window, operand 0']
    #allocation10 [shape = 'u8[16384]{0}', space=vmem, size = 0x4000, scoped, tag = 'output window, operand 1']
    #allocation11 [shape = 's32[2]{0}', space=sflag, size = 0x8, scoped, tag = 'scoped memory for tpu_custom_call.1']
    %10 = vsyncpa [#allocation5], 0
    %11 = vsyncpa [#allocation3], 0
    %s12 = scalar_lea.sflag [#allocation3], 1
    %13 = vsyncpa %s12, 0
    %14 = vsyncpa [#allocation8], 0
    %s15 = scalar_lea.sflag [#allocation8], 1
    %16 = vsyncpa %s15, 0
    %17 = vsyncpa [#allocation4], 0
    %s18 = scalar_lea.sflag [#allocation4], 1
    %19 = vsyncpa %s18, 0
    %20 = vsyncpa [#allocation11], 0
    %s21 = scalar_lea.sflag [#allocation11], 1
    %22 = vsyncpa %s21, 0
    loop: start=0, step=1, limit=4
    $region2: #{tpu_custom_call.1} parent=1 // loop_pre_header
      _
    $region3: #{tpu_custom_call.1} parent=1 // loop_header
      %s24 = sphi 0, %s28
      %p25 = scmp.ge.s32.totalorder %s24, 4
      %s31 = sphi 0, %s50
      %s32 = sphi 0, %s46
      %s33 = sphi 0, %s42
      %s34 = sphi 0, %s31
      %s35 = sphi 0, %s32
      %s36 = sphi 0, %s33
      %s37 = sphi 0, %s34
      %s38 = sphi 0, %s35
      %s39 = sphi 0, %s36
      %s51 = sphi 0, %s51
      %s53 = sphi 0, %s51
      %s54 = sphi 0, %s53
      %s68 = sphi 0, %s54
      %s78 = sphi 0, %s80
      %s81 = sphi 0, %s78
      %s82 = sphi 0, %s81
      %s98 = sphi 0, %s82
      %s108 = sphi 0, %s110
      %s111 = sphi 0, %s108
      %s112 = sphi 0, %s111
      %s128 = sphi 0, %s112
      %s138 = sphi 0, %s140
      %s141 = sphi 0, %s138
      %s142 = sphi 0, %s141
      %s158 = sphi 0, %s142
      %s168 = sphi 0, %s170
      %s171 = sphi 0, %s168
      %s172 = sphi 0, %s171
      %s188 = sphi 0, %s172
    $region4: #{tpu_custom_call.1} parent=1 // loop_header_branch
      %27 = sbr.rel (%p25) target = $region8
    $region5: #{tpu_custom_call.1} parent=1 // loop_body
      %s29 = ssub.s32 %s24, 1
      %s30 = ssub.s32 %s24, 2
      %s40 = sadd.s32 1, %s33
      %p41 = scmp.ge.s32.totalorder %s40, 1
      %s42 = scalar_select %p41, 0, %s40
      %s43 = sadd.s32 1, %s32
      %s44 = scalar_select %p41, %s43, %s32
      %p45 = scmp.ge.s32.totalorder %s44, 1
      %s46 = scalar_select %p45, 0, %s44
      %s47 = sadd.s32 1, %s31
      %s48 = scalar_select %p45, %s47, %s31
      %p49 = scmp.ge.s32.totalorder %s48, 2
      %s50 = scalar_select %p49, 0, %s48
      %s52 = sadd.s32 %s51, 1
      %p55 = scmp.eq.s32.totalorder %s24, 1
      %p56 = scmp.ne.s32.totalorder %s51, %s53
      %p57 = scmp.eq.s32.totalorder %s24, 0
      %p58 = por %p56, %p57
      %p59 = scmp.ne.s32.totalorder %s51, %s53
      %p60 = scmp.eq.s32.totalorder %s29, 1
      %p61 = por %p59, %p60
      %p62 = scmp.ne.s32.totalorder %s53, %s54
      %p63 = scmp.eq.s32.totalorder %s29, 0
      %p64 = por %p62, %p63
      %p65 = scmp.ne.s32.totalorder %s53, %s54
      %p66 = scmp.eq.s32.totalorder %s30, 1
      %p67 = por %p65, %p66
      %p69 = scmp.ne.s32.totalorder %s54, %s68
      %p70 = scmp.eq.s32.totalorder %s30, 0
      %p71 = por %p69, %p70
      %s72 = ssub.s32 %s31, %s50
      %s73 = ssub.s32 %s32, %s46
      %s74 = sor.u32 %s72, %s73
      %s75 = ssub.s32 %s33, %s42
      %s76 = sor.u32 %s74, %s75
      %p77 = scmp.eq.s32.totalorder %s76, 0
      %s79 = sadd.s32 %s78, 1
      %s80 = scalar_select %p77, %s78, %s79
      %p83 = pneg %p77
      %p84 = scmp.eq.s32.totalorder %s24, 1
      %p85 = por %p83, %p84
      %p86 = scmp.ne.s32.totalorder %s78, %s81
      %p87 = scmp.eq.s32.totalorder %s24, 0
      %p88 = por %p86, %p87
      %p89 = scmp.ne.s32.totalorder %s78, %s81
      %p90 = scmp.eq.s32.totalorder %s29, 1
      %p91 = por %p89, %p90
      %p92 = scmp.ne.s32.totalorder %s81, %s82
      %p93 = scmp.eq.s32.totalorder %s29, 0
      %p94 = por %p92, %p93
      %p95 = scmp.ne.s32.totalorder %s81, %s82
      %p96 = scmp.eq.s32.totalorder %s30, 1
      %p97 = por %p95, %p96
      %p99 = scmp.ne.s32.totalorder %s82, %s98
      %p100 = scmp.eq.s32.totalorder %s30, 0
      %p101 = por %p99, %p100
      %s102 = ssub.s32 %s31, %s50
      %s103 = ssub.s32 %s32, %s46
      %s104 = sor.u32 %s102, %s103
      %s105 = ssub.s32 %s33, %s42
      %s106 = sor.u32 %s104, %s105
      %p107 = scmp.eq.s32.totalorder %s106, 0
      %s109 = sadd.s32 %s108, 1
      %s110 = scalar_select %p107, %s108, %s109
      %p113 = pneg %p107
      %p114 = scmp.eq.s32.totalorder %s24, 1
      %p115 = por %p113, %p114
      %p116 = scmp.ne.s32.totalorder %s108, %s111
      %p117 = scmp.eq.s32.totalorder %s24, 0
      %p118 = por %p116, %p117
      %p119 = scmp.ne.s32.totalorder %s108, %s111
      %p120 = scmp.eq.s32.totalorder %s29, 1
      %p121 = por %p119, %p120
      %p122 = scmp.ne.s32.totalorder %s111, %s112
      %p123 = scmp.eq.s32.totalorder %s29, 0
      %p124 = por %p122, %p123
      %p125 = scmp.ne.s32.totalorder %s111, %s112
      %p126 = scmp.eq.s32.totalorder %s30, 1
      %p127 = por %p125, %p126
      %p129 = scmp.ne.s32.totalorder %s112, %s128
      %p130 = scmp.eq.s32.totalorder %s30, 0
      %p131 = por %p129, %p130
      %s132 = ssub.s32 %s31, %s50
      %s133 = ssub.s32 %s32, %s46
      %s134 = sor.u32 %s132, %s133
      %s135 = ssub.s32 %s33, %s42
      %s136 = sor.u32 %s134, %s135
      %p137 = scmp.eq.s32.totalorder %s136, 0
      %s139 = sadd.s32 %s138, 1
      %s140 = scalar_select %p137, %s138, %s139
      %p143 = pneg %p137
      %p144 = scmp.eq.s32.totalorder %s24, 1
      %p145 = por %p143, %p144
      %p146 = scmp.ne.s32.totalorder %s138, %s141
      %p147 = scmp.eq.s32.totalorder %s24, 0
      %p148 = por %p146, %p147
      %p149 = scmp.ne.s32.totalorder %s138, %s141
      %p150 = scmp.eq.s32.totalorder %s29, 1
      %p151 = por %p149, %p150
      %p152 = scmp.ne.s32.totalorder %s141, %s142
      %p153 = scmp.eq.s32.totalorder %s29, 0
      %p154 = por %p152, %p153
      %p155 = scmp.ne.s32.totalorder %s141, %s142
      %p156 = scmp.eq.s32.totalorder %s30, 1
      %p157 = por %p155, %p156
      %p159 = scmp.ne.s32.totalorder %s142, %s158
      %p160 = scmp.eq.s32.totalorder %s30, 0
      %p161 = por %p159, %p160
      %s162 = ssub.s32 %s31, %s50
      %s163 = ssub.s32 %s32, %s46
      %s164 = sor.u32 %s162, %s163
      %s165 = ssub.s32 %s33, %s42
      %s166 = sor.u32 %s164, %s165
      %p167 = scmp.eq.s32.totalorder %s166, 0
      %s169 = sadd.s32 %s168, 1
      %s170 = scalar_select %p167, %s168, %s169
      %p173 = pneg %p167
      %p174 = scmp.eq.s32.totalorder %s24, 1
      %p175 = por %p173, %p174
      %p176 = scmp.ne.s32.totalorder %s168, %s171
      %p177 = scmp.eq.s32.totalorder %s24, 0
      %p178 = por %p176, %p177
      %p179 = scmp.ne.s32.totalorder %s168, %s171
      %p180 = scmp.eq.s32.totalorder %s29, 1
      %p181 = por %p179, %p180
      %p182 = scmp.ne.s32.totalorder %s171, %s172
      %p183 = scmp.eq.s32.totalorder %s29, 0
      %p184 = por %p182, %p183
      %p185 = scmp.ne.s32.totalorder %s171, %s172
      %p186 = scmp.eq.s32.totalorder %s30, 1
      %p187 = por %p185, %p186
      %p189 = scmp.ne.s32.totalorder %s172, %s188
      %p190 = scmp.eq.s32.totalorder %s30, 0
      %p191 = por %p189, %p190
      %p192 = scmp.le.s32.totalorder 1, %s24
      %p193 = scmp.lt.s32.totalorder %s24, 3
      %p194 = pnand %p192, %p193
      %p195 = pneg %p194
      // Predicated region
      $region9: #{tpu_custom_call.1} parent=5 // pred_check
        _
      $region10: #{tpu_custom_call.1} parent=5 // pred_check_branch
        %197 = sbr.rel (%p194) target = $region12
      $region11: #{tpu_custom_call.1} parent=5 // pred_region
        %s198 = ssub.s32 %s24, 1
        // Predicated region
        $region13: #{tpu_custom_call.1} parent=11 // pred_check
          %p199 = pneg %p64
        $region14: #{tpu_custom_call.1} parent=11 // pred_check_branch
          %201 = sbr.rel (%p199) target = $region16
        $region15: #{tpu_custom_call.1} parent=11 // pred_region
          %s203 = ssub.s32 16, 16
          %204 = vsyncadd [#allocation5], %s203
          %207 = dma.hbm_to_smem %s0, 16, [#allocation2], [#allocation5]
        $region16: #{tpu_custom_call.1} parent=11 // pred_fallthru
          _
      $region12: #{tpu_custom_call.1} parent=5 // pred_fallthru
        _
      %p208 = scmp.lt.s32.totalorder %s24, 2
      // Predicated region
      $region17: #{tpu_custom_call.1} parent=5 // pred_check
        %p209 = pneg %p208
      $region18: #{tpu_custom_call.1} parent=5 // pred_check_branch
        %211 = sbr.rel (%p209) target = $region20
      $region19: #{tpu_custom_call.1} parent=5 // pred_region
        // Predicated region
        $region21: #{tpu_custom_call.1} parent=19 // pred_check
          %p212 = pneg %p88
        $region22: #{tpu_custom_call.1} parent=19 // pred_check_branch
          %214 = sbr.rel (%p212) target = $region24
        $region23: #{tpu_custom_call.1} parent=19 // pred_region
          %s215 = sand.u32 %s78, 1
          %s216 = scalar_lea.sflag [#allocation3], %s215
          %s217 = sand.u32 %s78, 1
          %s218 = smul.addr %s217, 96
          %s219 = scalar_lea.vmem [#allocation6], %s218
          %s220 = smul.u32 2, %s32
          %s222 = ssub.s32 1536, 1536
          %223 = vsyncadd %s216, %s222
          %s224 = sadd.s32 %s33, %s220
          %s225 = smul.addr %s31, 12
          %s226 = sadd.s32 %s224, %s225
          %s227 = smul.addr %s226, 128
          %s228 = scalar_lea.hbm %s1, %s227
          %s229 = sshll.u32 %s219, 4
          %s230 = int_to_ptr.vmem [resolvable:$true] %s229
          %235 = dma.hbm_to_vmem [thread:$0]  %s228, 1536, %s230, %s216, 128, 128, 8
        $region24: #{tpu_custom_call.1} parent=19 // pred_fallthru
          _
        // Predicated region
        $region25: #{tpu_custom_call.1} parent=19 // pred_check
          %p236 = pneg %p118
        $region26: #{tpu_custom_call.1} parent=19 // pred_check_branch
          %238 = sbr.rel (%p236) target = $region28
        $region27: #{tpu_custom_call.1} parent=19 // pred_region
          %s239 = sand.u32 %s108, 1
          %s240 = scalar_lea.sflag [#allocation8], %s239
          %s241 = sand.u32 %s108, 1
          %s242 = smul.addr %s241, 16
          %s243 = scalar_lea.vmem [#allocation7], %s242
          %s244 = smul.u32 2, %s32
          %s246 = ssub.s32 256, 256
          %247 = vsyncadd %s240, %s246
          %s248 = sadd.s32 %s33, %s244
          %s249 = smul.addr %s31, 2
          %s250 = sadd.s32 %s248, %s249
          %s251 = smul.addr %s250, 128
          %s252 = scalar_lea.hbm %s2, %s251
          %s253 = sshll.u32 %s243, 4
          %s254 = int_to_ptr.vmem [resolvable:$true] %s253
          %259 = dma.hbm_to_vmem [thread:$0]  %s252, 256, %s254, %s240, 128, 128, 8
        $region28: #{tpu_custom_call.1} parent=19 // pred_fallthru
          _
      $region20: #{tpu_custom_call.1} parent=5 // pred_fallthru
        _
      %p260 = scmp.le.s32.totalorder 1, %s24
      %p261 = scmp.lt.s32.totalorder %s24, 3
      %p262 = pnand %p260, %p261
      %p263 = pneg %p262
      // Predicated region
      $region29: #{tpu_custom_call.1} parent=5 // pred_check
        _
      $region30: #{tpu_custom_call.1} parent=5 // pred_check_branch
        %265 = sbr.rel (%p262) target = $region32
      $region31: #{tpu_custom_call.1} parent=5 // pred_region
        %s266 = ssub.s32 %s24, 1
        // Predicated region
        $region33: #{tpu_custom_call.1} parent=31 // pred_check
          %p267 = pneg %p64
        $region34: #{tpu_custom_call.1} parent=31 // pred_check_branch
          %269 = sbr.rel (%p267) target = $region36
        $region35: #{tpu_custom_call.1} parent=31 // pred_region
          %270 = dma.done [#allocation5], 16
        $region36: #{tpu_custom_call.1} parent=31 // pred_fallthru
          _
        %s271 = sand.u32 %s81, 1
        %s272 = scalar_lea.sflag [#allocation3], %s271
        %s273 = sand.u32 %s81, 1
        %s274 = smul.addr %s273, 96
        %s275 = scalar_lea.vmem [#allocation6], %s274
        // Predicated region
        $region37: #{tpu_custom_call.1} parent=31 // pred_check
          %p276 = pneg %p94
        $region38: #{tpu_custom_call.1} parent=31 // pred_check_branch
          %278 = sbr.rel (%p276) target = $region40
        $region39: #{tpu_custom_call.1} parent=31 // pred_region
          %279 = dma.done %s272, 1536
        $region40: #{tpu_custom_call.1} parent=31 // pred_fallthru
          _
        %s280 = sand.u32 %s111, 1
        %s281 = scalar_lea.sflag [#allocation8], %s280
        %s282 = sand.u32 %s111, 1
        %s283 = smul.addr %s282, 16
        %s284 = scalar_lea.vmem [#allocation7], %s283
        // Predicated region
        $region41: #{tpu_custom_call.1} parent=31 // pred_check
          %p285 = pneg %p124
        $region42: #{tpu_custom_call.1} parent=31 // pred_check_branch
          %287 = sbr.rel (%p285) target = $region44
        $region43: #{tpu_custom_call.1} parent=31 // pred_region
          %288 = dma.done %s281, 256
        $region44: #{tpu_custom_call.1} parent=31 // pred_fallthru
          _
        %289 = sfence
        %p290 = pneg %p64
        %p291 = pneg %p61
        %s292 = sand.u32 %s81, 1
        %s293 = scalar_lea.sflag [#allocation3], %s292
        %s294 = sand.u32 %s81, 1
        %s295 = smul.addr %s294, 96
        %s296 = scalar_lea.vmem [#allocation6], %s295
        %p297 = pneg %p94
        %p298 = pneg %p91
        %s299 = sand.u32 %s111, 1
        %s300 = scalar_lea.sflag [#allocation8], %s299
        %s301 = sand.u32 %s111, 1
        %s302 = smul.addr %s301, 16
        %s303 = scalar_lea.vmem [#allocation7], %s302
        %p304 = pneg %p124
        %p305 = pneg %p121
        %p306 = pneg %p154
        %p307 = pneg %p151
        %s308 = sand.u32 %s141, 1
        %s309 = scalar_lea.sflag [#allocation4], %s308
        %s310 = sand.u32 %s141, 1
        %s311 = smul.addr %s310, 16
        %s312 = scalar_lea.vmem [#allocation9], %s311
        %p313 = pneg %p184
        %p314 = pneg %p181
        %s315 = sand.u32 %s171, 1
        %s316 = scalar_lea.sflag [#allocation11], %s315
        %s317 = sand.u32 %s171, 1
        %s318 = smul.addr %s317, 16
        %s319 = scalar_lea.vmem [#allocation10], %s318
        %s320 = smul.u32 2, %s35
        %s321 = smul.u32 2, %s35
        %s322 = smul.u32 2, %s35
        %s323 = smul.u32 2, %s35
        %v324 = vld [vmem:[%s284] sm:$0xff]
        %v325 = vld [vmem:[%s284 + $0x8] sm:$0xff]
        %vm326 = vcmp.ne.s32.totalorder %v324, 4294967295
        %vm327 = vcmp.ne.s32.totalorder %v325, 4294967295
        %v328 = vsel %vm326, %v324, 0
        %v329 = vsel %vm327, %v325, 0
        %v330 = vld [vmem:[%s275] sm:$0xff]
        %v331 = vld [vmem:[%s275 + $0x8] sm:$0xff]
        %s332 = scalar_lea.vmem %s275, 16 [#allocation6]
        %v333 = vld [vmem:[%s332] sm:$0xff]
        %v334 = vld [vmem:[%s332 + $0x8] sm:$0xff]
        %v335 = vmax.f32 %v330, %v333
        %v336 = vmax.f32 %v331, %v334
        %s337 = scalar_lea.vmem %s275, 32 [#allocation6]
        %v338 = vld [vmem:[%s337] sm:$0xff]
        %v339 = vld [vmem:[%s337 + $0x8] sm:$0xff]
        %v340 = vmax.f32 %v335, %v338
        %v341 = vmax.f32 %v336, %v339
        %s342 = scalar_lea.vmem %s275, 48 [#allocation6]
        %v343 = vld [vmem:[%s342] sm:$0xff]
        %v344 = vld [vmem:[%s342 + $0x8] sm:$0xff]
        %v345 = vmax.f32 %v340, %v343
        %v346 = vmax.f32 %v341, %v344
        %s347 = scalar_lea.vmem %s275, 64 [#allocation6]
        %v348 = vld [vmem:[%s347] sm:$0xff]
        %v349 = vld [vmem:[%s347 + $0x8] sm:$0xff]
        %v350 = vmax.f32 %v345, %v348
        %v351 = vmax.f32 %v346, %v349
        %s352 = scalar_lea.vmem %s275, 80 [#allocation6]
        %v353 = vld [vmem:[%s352] sm:$0xff]
        %v354 = vld [vmem:[%s352 + $0x8] sm:$0xff]
        %v355 = vmax.f32 %v350, %v353
        %v356 = vmax.f32 %v351, %v354
        %v357 = vsub.f32 %v330, %v355
        %v358 = vsub.f32 %v331, %v356
        %v359 = vmul.f32 %v357, 1.442695
        %v360 = vpow.pop %v359
        %v361 = vmul.f32 %v358, 1.442695
        %v362 = vpow.pop %v361
        %v363 = vadd.f32 %v360, 0.0
        %v364 = vadd.f32 %v362, 0.0
        %vm365 = vcmp.eq.s32.totalorder %v328, 0
        %vm366 = vcmp.eq.s32.totalorder %v329, 0
        %v367 = vsel %vm365, %v357, 0.0
        %v368 = vsel %vm366, %v358, 0.0
        %s369 = sld [smem:[#allocation2]]
        %v370 = vstv %s369
        %v371 = vsel %vm365, %v370, 0.0
        %v372 = vsel %vm366, %v370, 0.0
        %v373 = vsub.f32 %v333, %v355
        %v374 = vsub.f32 %v334, %v356
        %v375 = vmul.f32 %v373, 1.442695
        %v376 = vpow.pop %v375
        %v377 = vmul.f32 %v374, 1.442695
        %v378 = vpow.pop %v377
        %v379 = vadd.f32 %v363, %v376
        %v380 = vadd.f32 %v364, %v378
        %vm381 = vcmp.eq.s32.totalorder %v328, 1
        %vm382 = vcmp.eq.s32.totalorder %v329, 1
        %v383 = vsel %vm381, %v373, %v367
        %v384 = vsel %vm382, %v374, %v368
        %s385 = sld [smem:[#allocation2 + $0x1]]
        %v386 = vstv %s385
        %v387 = vsel %vm381, %v386, %v371
        %v388 = vsel %vm382, %v386, %v372
        %v389 = vsub.f32 %v338, %v355
        %v390 = vsub.f32 %v339, %v356
        %v391 = vmul.f32 %v389, 1.442695
        %v392 = vpow.pop %v391
        %v393 = vmul.f32 %v390, 1.442695
        %v394 = vpow.pop %v393
        %v395 = vadd.f32 %v379, %v392
        %v396 = vadd.f32 %v380, %v394
        %vm397 = vcmp.eq.s32.totalorder %v328, 2
        %vm398 = vcmp.eq.s32.totalorder %v329, 2
        %v399 = vsel %vm397, %v389, %v383
        %v400 = vsel %vm398, %v390, %v384
        %s401 = sld [smem:[#allocation2 + $0x2]]
        %v402 = vstv %s401
        %v403 = vsel %vm397, %v402, %v387
        %v404 = vsel %vm398, %v402, %v388
        %v405 = vsub.f32 %v343, %v355
        %v406 = vsub.f32 %v344, %v356
        %v407 = vmul.f32 %v405, 1.442695
        %v408 = vpow.pop %v407
        %v409 = vmul.f32 %v406, 1.442695
        %v410 = vpow.pop %v409
        %v411 = vadd.f32 %v395, %v408
        %v412 = vadd.f32 %v396, %v410
        %vm413 = vcmp.eq.s32.totalorder %v328, 3
        %vm414 = vcmp.eq.s32.totalorder %v329, 3
        %v415 = vsel %vm413, %v405, %v399
        %v416 = vsel %vm414, %v406, %v400
        %s417 = sld [smem:[#allocation2 + $0x3]]
        %v418 = vstv %s417
        %v419 = vsel %vm413, %v418, %v403
        %v420 = vsel %vm414, %v418, %v404
        %v421 = vsub.f32 %v348, %v355
        %v422 = vsub.f32 %v349, %v356
        %v423 = vmul.f32 %v421, 1.442695
        %v424 = vpow.pop %v423
        %v425 = vmul.f32 %v422, 1.442695
        %v426 = vpow.pop %v425
        %v427 = vadd.f32 %v411, %v424
        %v428 = vadd.f32 %v412, %v426
        %vm429 = vcmp.eq.s32.totalorder %v328, 4
        %vm430 = vcmp.eq.s32.totalorder %v329, 4
        %v431 = vsel %vm429, %v421, %v415
        %v432 = vsel %vm430, %v422, %v416
        %s433 = sld [smem:[#allocation2 + $0x4]]
        %v434 = vstv %s433
        %v435 = vsel %vm429, %v434, %v419
        %v436 = vsel %vm430, %v434, %v420
        %v437 = vsub.f32 %v353, %v355
        %v438 = vsub.f32 %v354, %v356
        %v439 = vmul.f32 %v437, 1.442695
        %v440 = vpow.pop %v439
        %v441 = vmul.f32 %v438, 1.442695
        %v442 = vpow.pop %v441
        %v443 = vadd.f32 %v427, %v440
        %v444 = vadd.f32 %v428, %v442
        %vm445 = vcmp.eq.s32.totalorder %v328, 5
        %vm446 = vcmp.eq.s32.totalorder %v329, 5
        %v447 = vsel %vm445, %v437, %v431
        %v448 = vsel %vm446, %v438, %v432
        %s449 = sld [smem:[#allocation2 + $0x5]]
        %v450 = vstv %s449
        %v451 = vsel %vm445, %v450, %v435
        %v452 = vsel %vm446, %v450, %v436
        %v453 = vlog2.pop %v443
        %v454 = vmul.f32 %v453, 0.6931472
        %v455 = vlog2.pop %v444
        %v456 = vmul.f32 %v455, 0.6931472
        %v457 = vsub.f32 %v447, %v454
        %v458 = vsub.f32 %v448, %v456
        %v459 = vsub.f32 0.0, %v451
        %v460 = vsub.f32 0.0, %v452
        %v461 = vmul.f32 %v459, %v457
        %v462 = vmul.f32 %v460, %v458
        %v463 = vsel %vm326, %v461, 0.0
        %v464 = vsel %vm327, %v462, 0.0
        %vm465 = vcmask 130048
        %466 = vst.msk [vmem:[%s312] sm:$0xff] %vm465, %v463
        %467 = vst.msk [vmem:[%s312 + $0x8] sm:$0xff] %vm465, %v464
        %v468 = vmul.f32 %v457, 1.442695
        %v469 = vpow.pop %v468
        %v470 = vmul.f32 %v458, 1.442695
        %v471 = vpow.pop %v470
        %v472 = vsel %vm326, %v469, inf
        %v473 = vsel %vm327, %v471, inf
        %474 = vst.msk [vmem:[%s319] sm:$0xff] %vm465, %v472
        %475 = vst.msk [vmem:[%s319 + $0x8] sm:$0xff] %vm465, %v473
        %s476 = sand.u32 %s141, 1
        %s477 = scalar_lea.sflag [#allocation4], %s476
        %s478 = sand.u32 %s141, 1
        %s479 = smul.addr %s478, 16
        %s480 = scalar_lea.vmem [#allocation9], %s479
        %s481 = sand.u32 %s171, 1
        %s482 = scalar_lea.sflag [#allocation11], %s481
        %s483 = sand.u32 %s171, 1
        %s484 = smul.addr %s483, 16
        %s485 = scalar_lea.vmem [#allocation10], %s484
        // Predicated region
        $region45: #{tpu_custom_call.1} parent=31 // pred_check
          %p486 = pneg %p151
        $region46: #{tpu_custom_call.1} parent=31 // pred_check_branch
          %488 = sbr.rel (%p486) target = $region48
        $region47: #{tpu_custom_call.1} parent=31 // pred_region
          %s489 = smul.u32 2, %s35
          %s491 = ssub.s32 256, 256
          %492 = vsyncadd %s477, %s491
          %s493 = sadd.s32 %s36, %s489
          %s494 = smul.addr %s34, 2
          %s495 = sadd.s32 %s493, %s494
          %s496 = smul.addr %s495, 128
          %s497 = scalar_lea.hbm %s3, %s496
          %s498 = sshll.u32 %s480, 4
          %s499 = int_to_ptr.vmem [resolvable:$true] %s498
          %504 = dma.vmem_to_hbm [thread:$0]  %s499, 256, %s497, %s477, 128, 128, 8
        $region48: #{tpu_custom_call.1} parent=31 // pred_fallthru
          _
        // Predicated region
        $region49: #{tpu_custom_call.1} parent=31 // pred_check
          %p505 = pneg %p181
        $region50: #{tpu_custom_call.1} parent=31 // pred_check_branch
          %507 = sbr.rel (%p505) target = $region52
        $region51: #{tpu_custom_call.1} parent=31 // pred_region
          %s508 = smul.u32 2, %s35
          %s510 = ssub.s32 256, 256
          %511 = vsyncadd %s482, %s510
          %s512 = sadd.s32 %s36, %s508
          %s513 = smul.addr %s34, 2
          %s514 = sadd.s32 %s512, %s513
          %s515 = smul.addr %s514, 128
          %s516 = scalar_lea.hbm %s4, %s515
          %s517 = sshll.u32 %s485, 4
          %s518 = int_to_ptr.vmem [resolvable:$true] %s517
          %523 = dma.vmem_to_hbm [thread:$0]  %s518, 256, %s516, %s482, 128, 128, 8
        $region52: #{tpu_custom_call.1} parent=31 // pred_fallthru
          _
      $region32: #{tpu_custom_call.1} parent=5 // pred_fallthru
        _
      %p524 = scmp.le.s32.totalorder 2, %s24
      // Predicated region
      $region53: #{tpu_custom_call.1} parent=5 // pred_check
        %p525 = pneg %p524
      $region54: #{tpu_custom_call.1} parent=5 // pred_check_branch
        %527 = sbr.rel (%p525) target = $region56
      $region55: #{tpu_custom_call.1} parent=5 // pred_region
        %s528 = ssub.s32 %s24, 2
        // Predicated region
        $region57: #{tpu_custom_call.1} parent=55 // pred_check
          %p529 = pneg %p157
        $region58: #{tpu_custom_call.1} parent=55 // pred_check_branch
          %531 = sbr.rel (%p529) target = $region60
        $region59: #{tpu_custom_call.1} parent=55 // pred_region
          %s532 = sand.u32 %s142, 1
          %s533 = scalar_lea.sflag [#allocation4], %s532
          %s534 = sand.u32 %s142, 1
          %s535 = smul.addr %s534, 16
          %s536 = scalar_lea.vmem [#allocation9], %s535
          %537 = dma.done %s533, 256
        $region60: #{tpu_custom_call.1} parent=55 // pred_fallthru
          _
        // Predicated region
        $region61: #{tpu_custom_call.1} parent=55 // pred_check
          %p538 = pneg %p187
        $region62: #{tpu_custom_call.1} parent=55 // pred_check_branch
          %540 = sbr.rel (%p538) target = $region64
        $region63: #{tpu_custom_call.1} parent=55 // pred_region
          %s541 = sand.u32 %s172, 1
          %s542 = scalar_lea.sflag [#allocation11], %s541
          %s543 = sand.u32 %s172, 1
          %s544 = smul.addr %s543, 16
          %s545 = scalar_lea.vmem [#allocation10], %s544
          %546 = dma.done %s542, 256
        $region64: #{tpu_custom_call.1} parent=55 // pred_fallthru
          _
      $region56: #{tpu_custom_call.1} parent=5 // pred_fallthru
        _
    $region6: #{tpu_custom_call.1} parent=1 // loop_footer
      %s28 = sadd.s32 1, %s24
    $region7: #{tpu_custom_call.1} parent=1 // loop_footer_branch
      %23 = sbr.rel target = $region3
    $region8: #{tpu_custom_call.1} parent=1 // loop_exit
      _
    %547 = vsyncpa [#allocation3], 1
    %s548 = scalar_lea.sflag [#allocation3], 1
    %549 = vsyncpa %s548, 1
    %550 = vsyncpa [#allocation8], 1
    %s551 = scalar_lea.sflag [#allocation8], 1
    %552 = vsyncpa %s551, 1
    %553 = vsyncpa [#allocation4], 1
    %s554 = scalar_lea.sflag [#allocation4], 1
    %555 = vsyncpa %s554, 1
    %556 = vsyncpa [#allocation11], 1
    %s557 = scalar_lea.sflag [#allocation11], 1
    %558 = vsyncpa %s557, 1
    %559 = vsyncpa [#allocation5], 1
    %s560 = scalar_lea.sflag [#allocation5], 1
    %561 = vsyncpa %s560, 1

</llo_original>
